<compile_context>
chip_gen: v7x
topology: tpu7x:2x2x1
jax: 0.10.0
libtpu: 0.0.40
codegen_flags: <defaults>
</compile_context>

<pallas_src>
import functools

import jax
import jax.numpy as jnp
from jax import lax
from jax.experimental import pallas as pl
from jax.experimental.pallas import tpu as pltpu


def _basic_block_kernel(x_ref, w1_ref, w2_ref, s1_ref, b1_ref, s2_ref, b2_ref,
                        out_ref, buf1, buf2, *, H, W, PADL):
    # x_ref:   (1, C, S)   one image, channels on sublanes, S = H*W on lanes
    # w1_ref:  (P, 9*C)    conv1 weights, im2col layout
    # w2_ref:  (P, 9*P)    conv2 weights, im2col layout
    # s*/b*:   (P, 1)      folded BatchNorm scale / bias (per out-channel)
    # out_ref: (1, P, S)   lane-dense output block
    # buf1/2:  (C, SPAD) / (P, SPAD) flat lane-padded staging buffers
    C = x_ref.shape[1]
    P = out_ref.shape[1]
    S = H * W
    SPAD = buf1.shape[1]

    x = x_ref[0].astype(jnp.float32)                       # (C, S)

    # Lane masks for the W (column) boundary of the 3x3 stencil.
    col = lax.broadcasted_iota(jnp.int32, (1, S), 1) % W
    mask_l = col != 0                # tap dx == 0 invalid at w == 0
    mask_r = col != (W - 1)          # tap dx == 2 invalid at w == W-1
    base = PADL - W - 1              # slice start of tap (dy=0, dx=0)

    def stage(buf, act, nchan):
        # Zero only the halo lanes (every grid step), then write the
        # activation at the lane-aligned offset PADL (unmasked stores).
        buf[:, :PADL] = jnp.zeros((nchan, PADL), jnp.float32)
        buf[:, PADL + S:] = jnp.zeros((nchan, SPAD - PADL - S), jnp.float32)
        buf[:, PADL:PADL + S] = act

    def im2col(buf):
        # (9*nchan, S) patch matrix: 9 static lane-slices + 2 lane masks.
        parts = []
        for dy in range(3):
            for dx in range(3):
                start = base + dy * W + dx
                patch = buf[:, start:start + S]
                if dx == 0:
                    patch = jnp.where(mask_l, patch, 0.0)
                elif dx == 2:
                    patch = jnp.where(mask_r, patch, 0.0)
                parts.append(patch)
        return jnp.concatenate(parts, axis=0)

    # ---- conv1 as a single K=9*C MXU matmul, bn1 (folded) + relu --------
    stage(buf1, x, C)
    acc1 = jnp.dot(w1_ref[...], im2col(buf1),
                   preferred_element_type=jnp.float32)      # (P, S)
    y = jnp.maximum(acc1 * s1_ref[...] + b1_ref[...], 0.0)

    # ---- conv2 as a single K=9*P MXU matmul, bn2 + residual + relu ------
    stage(buf2, y, P)
    acc2 = jnp.dot(w2_ref[...], im2col(buf2),
                   preferred_element_type=jnp.float32)      # (P, S)
    out = jnp.maximum(acc2 * s2_ref[...] + b2_ref[...] + x, 0.0)
    out_ref[0] = out.astype(out_ref.dtype)


def basic_block_forward(x_nchw, w1, w2, s1, b1, s2, b2):
    """Fused BasicBlock forward.

    x_nchw: (N, C, H, W); w1/w2: HWIO (3,3,Cin,P); s*/b*: (P,) folded BN.
    Returns (N, P, H, W).
    """
    N, C, H, W = x_nchw.shape
    P = w1.shape[-1]
    assert C == P, "stride=1 / no-downsample BasicBlock requires inplanes == planes"
    S = H * W
    PADL = ((W + 1 + 127) // 128) * 128      # lane-aligned left halo >= W+1
    SPAD = PADL + S + W + 1                  # left halo + data + right halo

    # Free (contiguous) reshape: no NHWC transpose, no jnp.pad HBM copy.
    x_flat = x_nchw.reshape(N, C, S)
    # im2col weight layout: w_mat[p, (dy*3+dx)*Cin + c] = w[dy, dx, c, p]
    w1_mat = jnp.transpose(w1.reshape(9 * C, P))            # (P, 9*C)
    w2_mat = jnp.transpose(w2.reshape(9 * P, P))            # (P, 9*P)
    s1c, b1c = s1.reshape(P, 1), b1.reshape(P, 1)
    s2c, b2c = s2.reshape(P, 1), b2.reshape(P, 1)

    kernel = functools.partial(_basic_block_kernel, H=H, W=W, PADL=PADL)

    out_flat = pl.pallas_call(
        kernel,
        out_shape=jax.ShapeDtypeStruct((N, P, S), x_nchw.dtype),
        grid_spec=pltpu.PrefetchScalarGridSpec(
            num_scalar_prefetch=0,
            grid=(N,),
            in_specs=[
                pl.BlockSpec((1, C, S), lambda n: (n, 0, 0)),
                pl.BlockSpec((P, 9 * C), lambda n: (0, 0)),
                pl.BlockSpec((P, 9 * P), lambda n: (0, 0)),
                pl.BlockSpec((P, 1), lambda n: (0, 0)),
                pl.BlockSpec((P, 1), lambda n: (0, 0)),
                pl.BlockSpec((P, 1), lambda n: (0, 0)),
                pl.BlockSpec((P, 1), lambda n: (0, 0)),
            ],
            out_specs=pl.BlockSpec((1, P, S), lambda n: (n, 0, 0)),
            scratch_shapes=[
                pltpu.VMEM((C, SPAD), jnp.float32),
                pltpu.VMEM((P, SPAD), jnp.float32),
            ],
        ),
        compiler_params=pltpu.CompilerParams(
            dimension_semantics=("parallel",),
            # Explicit budget (fits v7x's 64 MiB physical VMEM with headroom;
            # actual use here is well under 1 MiB).
            vmem_limit_bytes=32 * 1024 * 1024,
        ),
    )(x_flat, w1_mat, w2_mat, s1c, b1c, s2c, b2c)

    return out_flat.reshape(N, P, H, W)


def fold_bn(gamma, beta, mean, var, eps=1e-5):
    scale = gamma / jnp.sqrt(var + eps)
    bias = beta - mean * scale
    return scale, bias                                       # (P,)


def reference_forward(x_nchw, w1, w2, s1, b1, s2, b2):
    """Pure-JAX (XLA conv) reference of the same computation."""
    x = jnp.transpose(x_nchw, (0, 2, 3, 1))
    dn = ('NHWC', 'HWIO', 'NHWC')
    y = lax.conv_general_dilated(x, w1, (1, 1), 'SAME', dimension_numbers=dn)
    y = jnp.maximum(y * s1 + b1, 0.0)
    y2 = lax.conv_general_dilated(y, w2, (1, 1), 'SAME', dimension_numbers=dn)
    y2 = y2 * s2 + b2
    out = jnp.maximum(y2 + x, 0.0)
    return jnp.transpose(out, (0, 3, 1, 2))


if __name__ == "__main__":
    # BasicBlock(inplanes=8, planes=8, stride=1, downsample=None)
    N, C, H, W = 2, 8, 16, 16
    P = C

    keys = jax.random.split(jax.random.PRNGKey(0), 11)
    x = jax.random.normal(keys[0], (N, C, H, W), jnp.float32)
    w1 = 0.1 * jax.random.normal(keys[1], (3, 3, C, P), jnp.float32)  # HWIO
    w2 = 0.1 * jax.random.normal(keys[2], (3, 3, P, P), jnp.float32)  # HWIO

    g1 = 1.0 + 0.1 * jax.random.normal(keys[3], (P,), jnp.float32)
    be1 = 0.1 * jax.random.normal(keys[4], (P,), jnp.float32)
    m1 = 0.1 * jax.random.normal(keys[5], (P,), jnp.float32)
    v1 = 1.0 + 0.5 * jax.random.uniform(keys[6], (P,), jnp.float32)

    g2 = 1.0 + 0.1 * jax.random.normal(keys[7], (P,), jnp.float32)
    be2 = 0.1 * jax.random.normal(keys[8], (P,), jnp.float32)
    m2 = 0.1 * jax.random.normal(keys[9], (P,), jnp.float32)
    v2 = 1.0 + 0.5 * jax.random.uniform(keys[10], (P,), jnp.float32)

    s1, b1 = fold_bn(g1, be1, m1, v1)
    s2, b2 = fold_bn(g2, be2, m2, v2)

    out = jax.block_until_ready(basic_block_forward(x, w1, w2, s1, b1, s2, b2))
    ref = jax.block_until_ready(reference_forward(x, w1, w2, s1, b1, s2, b2))

    assert out.shape == (N, P, H, W), out.shape
    assert jnp.allclose(out, ref, atol=1e-4, rtol=1e-4), "mismatch vs reference"
    print("KERNEL_OK")
</pallas_src>

<mosaic_0001>
module attributes {stable_mosaic.version = 11 : i64} {
  func.func @_basic_block_kernel(%arg0: i32, %arg1: memref<1x8x256xf32, #tpu.memory_space<vmem>>, %arg2: memref<8x72xf32, #tpu.memory_space<vmem>>, %arg3: memref<8x72xf32, #tpu.memory_space<vmem>>, %arg4: memref<8x1xf32, #tpu.memory_space<vmem>>, %arg5: memref<8x1xf32, #tpu.memory_space<vmem>>, %arg6: memref<8x1xf32, #tpu.memory_space<vmem>>, %arg7: memref<8x1xf32, #tpu.memory_space<vmem>>, %arg8: memref<1x8x256xf32, #tpu.memory_space<vmem>>, %arg9: memref<8x401xf32, #tpu.memory_space<vmem>>, %arg10: memref<8x401xf32, #tpu.memory_space<vmem>>) attributes {dimension_semantics = [#tpu.dimension_semantics<parallel>], iteration_bounds = array<i64: 2>, scalar_prefetch = 0 : i64, scratch_operands = 2 : i64, tpu.core_type = #tpu.core_type<tc>, window_params = [{transform_indices = @transform_0, window_bounds = array<i64: 1, 8, 256>}, {pipeline_mode = #tpu.pipeline_mode<synchronous>, transform_indices = @transform_1, window_bounds = array<i64: 8, 72>}, {pipeline_mode = #tpu.pipeline_mode<synchronous>, transform_indices = @transform_2, window_bounds = array<i64: 8, 72>}, {pipeline_mode = #tpu.pipeline_mode<synchronous>, transform_indices = @transform_3, window_bounds = array<i64: 8, 1>}, {pipeline_mode = #tpu.pipeline_mode<synchronous>, transform_indices = @transform_4, window_bounds = array<i64: 8, 1>}, {pipeline_mode = #tpu.pipeline_mode<synchronous>, transform_indices = @transform_5, window_bounds = array<i64: 8, 1>}, {pipeline_mode = #tpu.pipeline_mode<synchronous>, transform_indices = @transform_6, window_bounds = array<i64: 8, 1>}, {transform_indices = @transform_7, window_bounds = array<i64: 1, 8, 256>}]} {
    %c0 = arith.constant 0 : index
    %c0_0 = arith.constant 0 : index
    %c0_1 = arith.constant 0 : index
    %0 = vector.load %arg1[%c0, %c0_0, %c0_1] : memref<1x8x256xf32, #tpu.memory_space<vmem>>, vector<1x8x256xf32>
    %1 = vector.shape_cast %0 : vector<1x8x256xf32> to vector<8x256xf32>
    %2 = tpu.iota {dimensions = array<i32: 1>} : vector<1x256xi32>
    %c16_i32 = arith.constant 16 : i32
    %c0_i32 = arith.constant 0 : i32
    %3 = arith.cmpi eq, %c16_i32, %c0_i32 : i32
    %c1_i32 = arith.constant 1 : i32
    %4 = arith.select %3, %c1_i32, %c16_i32 : i32
    %5 = vector.broadcast %4 : i32 to vector<1x256xi32>
    %6 = arith.remsi %2, %5 : vector<1x256xi32>
    %c0_i32_2 = arith.constant 0 : i32
    %7 = vector.broadcast %c0_i32_2 : i32 to vector<1x256xi32>
    %8 = arith.cmpi ne, %6, %7 : vector<1x256xi32>
    %c0_i32_3 = arith.constant 0 : i32
    %9 = vector.broadcast %c0_i32_3 : i32 to vector<1x256xi32>
    %10 = arith.cmpi slt, %6, %9 : vector<1x256xi32>
    %c0_i32_4 = arith.constant 0 : i32
    %11 = arith.cmpi slt, %4, %c0_i32_4 : i32
    %12 = vector.broadcast %11 : i1 to vector<1x256xi1>
    %13 = vector.broadcast %12 : vector<1x256xi1> to vector<1x256xi1>
    %14 = arith.xori %10, %13 : vector<1x256xi1>
    %15 = arith.andi %14, %8 : vector<1x256xi1>
    %16 = vector.broadcast %4 : i32 to vector<1x256xi32>
    %17 = arith.addi %6, %16 : vector<1x256xi32>
    %18 = arith.select %15, %17, %6 : vector<1x256xi1>, vector<1x256xi32>
    %c0_i32_5 = arith.constant 0 : i32
    %19 = vector.broadcast %c0_i32_5 : i32 to vector<1x256xi32>
    %20 = arith.cmpi ne, %18, %19 : vector<1x256xi32>
    %c15_i32 = arith.constant 15 : i32
    %21 = vector.broadcast %c15_i32 : i32 to vector<1x256xi32>
    %22 = arith.cmpi ne, %18, %21 : vector<1x256xi32>
    %cst = arith.constant 0.000000e+00 : f32
    %23 = vector.broadcast %cst : f32 to vector<8x128xf32>
    %c0_6 = arith.constant 0 : index
    %c0_7 = arith.constant 0 : index
    %24 = vector.load %arg9[%c0_6, %c0_7] : memref<8x401xf32, #tpu.memory_space<vmem>>, vector<8x128xf32>
    tpu.vector_store %arg9[%c0_6, %c0_7], %23 {strides = array<i32>} : memref<8x401xf32, #tpu.memory_space<vmem>>, vector<8x128xf32>,
    %cst_8 = arith.constant 0.000000e+00 : f32
    %25 = vector.broadcast %cst_8 : f32 to vector<8x17xf32>
    %c0_9 = arith.constant 0 : index
    %c384 = arith.constant 384 : index
    %26 = vector.load %arg9[%c0_9, %c384] : memref<8x401xf32, #tpu.memory_space<vmem>>, vector<8x17xf32>
    tpu.vector_store %arg9[%c0_9, %c384], %25 {strides = array<i32>} : memref<8x401xf32, #tpu.memory_space<vmem>>, vector<8x17xf32>,
    %c0_10 = arith.constant 0 : index
    %c128 = arith.constant 128 : index
    %27 = vector.load %arg9[%c0_10, %c128] : memref<8x401xf32, #tpu.memory_space<vmem>>, vector<8x256xf32>
    tpu.vector_store %arg9[%c0_10, %c128], %1 {strides = array<i32>} : memref<8x401xf32, #tpu.memory_space<vmem>>, vector<8x256xf32>,
    %c0_11 = arith.constant 0 : index
    %c0_12 = arith.constant 0 : index
    %28 = vector.load %arg2[%c0_11, %c0_12] : memref<8x72xf32, #tpu.memory_space<vmem>>, vector<8x72xf32>
    %c0_13 = arith.constant 0 : index
    %c111 = arith.constant 111 : index
    %29 = vector.load %arg9[%c0_13, %c111] : memref<8x401xf32, #tpu.memory_space<vmem>>, vector<8x256xf32>
    %cst_14 = arith.constant 0.000000e+00 : f32
    %30 = vector.shape_cast %20 : vector<1x256xi1> to vector<1x256xi1>
    %31 = vector.broadcast %30 : vector<1x256xi1> to vector<8x256xi1>
    %32 = vector.broadcast %cst_14 : f32 to vector<8x256xf32>
    %33 = arith.select %31, %29, %32 : vector<8x256xi1>, vector<8x256xf32>
    %c0_15 = arith.constant 0 : index
    %c112 = arith.constant 112 : index
    %34 = vector.load %arg9[%c0_15, %c112] : memref<8x401xf32, #tpu.memory_space<vmem>>, vector<8x256xf32>
    %c0_16 = arith.constant 0 : index
    %c113 = arith.constant 113 : index
    %35 = vector.load %arg9[%c0_16, %c113] : memref<8x401xf32, #tpu.memory_space<vmem>>, vector<8x256xf32>
    %cst_17 = arith.constant 0.000000e+00 : f32
    %36 = vector.shape_cast %22 : vector<1x256xi1> to vector<1x256xi1>
    %37 = vector.broadcast %36 : vector<1x256xi1> to vector<8x256xi1>
    %38 = vector.broadcast %cst_17 : f32 to vector<8x256xf32>
    %39 = arith.select %37, %35, %38 : vector<8x256xi1>, vector<8x256xf32>
    %c0_18 = arith.constant 0 : index
    %c127 = arith.constant 127 : index
    %40 = vector.load %arg9[%c0_18, %c127] : memref<8x401xf32, #tpu.memory_space<vmem>>, vector<8x256xf32>
    %cst_19 = arith.constant 0.000000e+00 : f32
    %41 = vector.shape_cast %20 : vector<1x256xi1> to vector<1x256xi1>
    %42 = vector.broadcast %41 : vector<1x256xi1> to vector<8x256xi1>
    %43 = vector.broadcast %cst_19 : f32 to vector<8x256xf32>
    %44 = arith.select %42, %40, %43 : vector<8x256xi1>, vector<8x256xf32>
    %c0_20 = arith.constant 0 : index
    %c128_21 = arith.constant 128 : index
    %45 = vector.load %arg9[%c0_20, %c128_21] : memref<8x401xf32, #tpu.memory_space<vmem>>, vector<8x256xf32>
    %c0_22 = arith.constant 0 : index
    %c129 = arith.constant 129 : index
    %46 = vector.load %arg9[%c0_22, %c129] : memref<8x401xf32, #tpu.memory_space<vmem>>, vector<8x256xf32>
    %cst_23 = arith.constant 0.000000e+00 : f32
    %47 = vector.shape_cast %22 : vector<1x256xi1> to vector<1x256xi1>
    %48 = vector.broadcast %47 : vector<1x256xi1> to vector<8x256xi1>
    %49 = vector.broadcast %cst_23 : f32 to vector<8x256xf32>
    %50 = arith.select %48, %46, %49 : vector<8x256xi1>, vector<8x256xf32>
    %c0_24 = arith.constant 0 : index
    %c143 = arith.constant 143 : index
    %51 = vector.load %arg9[%c0_24, %c143] : memref<8x401xf32, #tpu.memory_space<vmem>>, vector<8x256xf32>
    %cst_25 = arith.constant 0.000000e+00 : f32
    %52 = vector.shape_cast %20 : vector<1x256xi1> to vector<1x256xi1>
    %53 = vector.broadcast %52 : vector<1x256xi1> to vector<8x256xi1>
    %54 = vector.broadcast %cst_25 : f32 to vector<8x256xf32>
    %55 = arith.select %53, %51, %54 : vector<8x256xi1>, vector<8x256xf32>
    %c0_26 = arith.constant 0 : index
    %c144 = arith.constant 144 : index
    %56 = vector.load %arg9[%c0_26, %c144] : memref<8x401xf32, #tpu.memory_space<vmem>>, vector<8x256xf32>
    %c0_27 = arith.constant 0 : index
    %c145 = arith.constant 145 : index
    %57 = vector.load %arg9[%c0_27, %c145] : memref<8x401xf32, #tpu.memory_space<vmem>>, vector<8x256xf32>
    %cst_28 = arith.constant 0.000000e+00 : f32
    %58 = vector.shape_cast %22 : vector<1x256xi1> to vector<1x256xi1>
    %59 = vector.broadcast %58 : vector<1x256xi1> to vector<8x256xi1>
    %60 = vector.broadcast %cst_28 : f32 to vector<8x256xf32>
    %61 = arith.select %59, %57, %60 : vector<8x256xi1>, vector<8x256xf32>
    %62 = tpu.concatenate %33, %34, %39, %44, %45, %50, %55, %56, %61 in 0 : vector<8x256xf32>, vector<8x256xf32>, vector<8x256xf32>, vector<8x256xf32>, vector<8x256xf32>, vector<8x256xf32>, vector<8x256xf32>, vector<8x256xf32>, vector<8x256xf32> -> vector<72x256xf32>
    %cst_29 = arith.constant dense<0.000000e+00> : vector<8x256xf32>
    %63 = tpu.matmul %28, %62, %cst_29 {dimension_numbers = #tpu.dot_dimension_numbers<[1], [0], [0], [1], [0, 0, 1, 1], [], []>} : vector<8x72xf32>, vector<72x256xf32>, vector<8x256xf32> -> vector<8x256xf32>
    %c0_30 = arith.constant 0 : index
    %c0_31 = arith.constant 0 : index
    %64 = vector.load %arg4[%c0_30, %c0_31] : memref<8x1xf32, #tpu.memory_space<vmem>>, vector<8x1xf32>
    %65 = vector.broadcast %64 : vector<8x1xf32> to vector<8x256xf32>
    %66 = arith.mulf %63, %65 : vector<8x256xf32>
    %c0_32 = arith.constant 0 : index
    %c0_33 = arith.constant 0 : index
    %67 = vector.load %arg5[%c0_32, %c0_33] : memref<8x1xf32, #tpu.memory_space<vmem>>, vector<8x1xf32>
    %68 = vector.broadcast %67 : vector<8x1xf32> to vector<8x256xf32>
    %69 = arith.addf %66, %68 : vector<8x256xf32>
    %cst_34 = arith.constant 0.000000e+00 : f32
    %70 = vector.broadcast %cst_34 : f32 to vector<8x256xf32>
    %71 = arith.maximumf %69, %70 : vector<8x256xf32>
    %cst_35 = arith.constant 0.000000e+00 : f32
    %72 = vector.broadcast %cst_35 : f32 to vector<8x128xf32>
    %c0_36 = arith.constant 0 : index
    %c0_37 = arith.constant 0 : index
    %73 = vector.load %arg10[%c0_36, %c0_37] : memref<8x401xf32, #tpu.memory_space<vmem>>, vector<8x128xf32>
    tpu.vector_store %arg10[%c0_36, %c0_37], %72 {strides = array<i32>} : memref<8x401xf32, #tpu.memory_space<vmem>>, vector<8x128xf32>,
    %cst_38 = arith.constant 0.000000e+00 : f32
    %74 = vector.broadcast %cst_38 : f32 to vector<8x17xf32>
    %c0_39 = arith.constant 0 : index
    %c384_40 = arith.constant 384 : index
    %75 = vector.load %arg10[%c0_39, %c384_40] : memref<8x401xf32, #tpu.memory_space<vmem>>, vector<8x17xf32>
    tpu.vector_store %arg10[%c0_39, %c384_40], %74 {strides = array<i32>} : memref<8x401xf32, #tpu.memory_space<vmem>>, vector<8x17xf32>,
    %c0_41 = arith.constant 0 : index
    %c128_42 = arith.constant 128 : index
    %76 = vector.load %arg10[%c0_41, %c128_42] : memref<8x401xf32, #tpu.memory_space<vmem>>, vector<8x256xf32>
    tpu.vector_store %arg10[%c0_41, %c128_42], %71 {strides = array<i32>} : memref<8x401xf32, #tpu.memory_space<vmem>>, vector<8x256xf32>,
    %c0_43 = arith.constant 0 : index
    %c0_44 = arith.constant 0 : index
    %77 = vector.load %arg3[%c0_43, %c0_44] : memref<8x72xf32, #tpu.memory_space<vmem>>, vector<8x72xf32>
    %c0_45 = arith.constant 0 : index
    %c111_46 = arith.constant 111 : index
    %78 = vector.load %arg10[%c0_45, %c111_46] : memref<8x401xf32, #tpu.memory_space<vmem>>, vector<8x256xf32>
    %cst_47 = arith.constant 0.000000e+00 : f32
    %79 = vector.shape_cast %20 : vector<1x256xi1> to vector<1x256xi1>
    %80 = vector.broadcast %79 : vector<1x256xi1> to vector<8x256xi1>
    %81 = vector.broadcast %cst_47 : f32 to vector<8x256xf32>
    %82 = arith.select %80, %78, %81 : vector<8x256xi1>, vector<8x256xf32>
    %c0_48 = arith.constant 0 : index
    %c112_49 = arith.constant 112 : index
    %83 = vector.load %arg10[%c0_48, %c112_49] : memref<8x401xf32, #tpu.memory_space<vmem>>, vector<8x256xf32>
    %c0_50 = arith.constant 0 : index
    %c113_51 = arith.constant 113 : index
    %84 = vector.load %arg10[%c0_50, %c113_51] : memref<8x401xf32, #tpu.memory_space<vmem>>, vector<8x256xf32>
    %cst_52 = arith.constant 0.000000e+00 : f32
    %85 = vector.shape_cast %22 : vector<1x256xi1> to vector<1x256xi1>
    %86 = vector.broadcast %85 : vector<1x256xi1> to vector<8x256xi1>
    %87 = vector.broadcast %cst_52 : f32 to vector<8x256xf32>
    %88 = arith.select %86, %84, %87 : vector<8x256xi1>, vector<8x256xf32>
    %c0_53 = arith.constant 0 : index
    %c127_54 = arith.constant 127 : index
    %89 = vector.load %arg10[%c0_53, %c127_54] : memref<8x401xf32, #tpu.memory_space<vmem>>, vector<8x256xf32>
    %cst_55 = arith.constant 0.000000e+00 : f32
    %90 = vector.shape_cast %20 : vector<1x256xi1> to vector<1x256xi1>
    %91 = vector.broadcast %90 : vector<1x256xi1> to vector<8x256xi1>
    %92 = vector.broadcast %cst_55 : f32 to vector<8x256xf32>
    %93 = arith.select %91, %89, %92 : vector<8x256xi1>, vector<8x256xf32>
    %c0_56 = arith.constant 0 : index
    %c128_57 = arith.constant 128 : index
    %94 = vector.load %arg10[%c0_56, %c128_57] : memref<8x401xf32, #tpu.memory_space<vmem>>, vector<8x256xf32>
    %c0_58 = arith.constant 0 : index
    %c129_59 = arith.constant 129 : index
    %95 = vector.load %arg10[%c0_58, %c129_59] : memref<8x401xf32, #tpu.memory_space<vmem>>, vector<8x256xf32>
    %cst_60 = arith.constant 0.000000e+00 : f32
    %96 = vector.shape_cast %22 : vector<1x256xi1> to vector<1x256xi1>
    %97 = vector.broadcast %96 : vector<1x256xi1> to vector<8x256xi1>
    %98 = vector.broadcast %cst_60 : f32 to vector<8x256xf32>
    %99 = arith.select %97, %95, %98 : vector<8x256xi1>, vector<8x256xf32>
    %c0_61 = arith.constant 0 : index
    %c143_62 = arith.constant 143 : index
    %100 = vector.load %arg10[%c0_61, %c143_62] : memref<8x401xf32, #tpu.memory_space<vmem>>, vector<8x256xf32>
    %cst_63 = arith.constant 0.000000e+00 : f32
    %101 = vector.shape_cast %20 : vector<1x256xi1> to vector<1x256xi1>
    %102 = vector.broadcast %101 : vector<1x256xi1> to vector<8x256xi1>
    %103 = vector.broadcast %cst_63 : f32 to vector<8x256xf32>
    %104 = arith.select %102, %100, %103 : vector<8x256xi1>, vector<8x256xf32>
    %c0_64 = arith.constant 0 : index
    %c144_65 = arith.constant 144 : index
    %105 = vector.load %arg10[%c0_64, %c144_65] : memref<8x401xf32, #tpu.memory_space<vmem>>, vector<8x256xf32>
    %c0_66 = arith.constant 0 : index
    %c145_67 = arith.constant 145 : index
    %106 = vector.load %arg10[%c0_66, %c145_67] : memref<8x401xf32, #tpu.memory_space<vmem>>, vector<8x256xf32>
    %cst_68 = arith.constant 0.000000e+00 : f32
    %107 = vector.shape_cast %22 : vector<1x256xi1> to vector<1x256xi1>
    %108 = vector.broadcast %107 : vector<1x256xi1> to vector<8x256xi1>
    %109 = vector.broadcast %cst_68 : f32 to vector<8x256xf32>
    %110 = arith.select %108, %106, %109 : vector<8x256xi1>, vector<8x256xf32>
    %111 = tpu.concatenate %82, %83, %88, %93, %94, %99, %104, %105, %110 in 0 : vector<8x256xf32>, vector<8x256xf32>, vector<8x256xf32>, vector<8x256xf32>, vector<8x256xf32>, vector<8x256xf32>, vector<8x256xf32>, vector<8x256xf32>, vector<8x256xf32> -> vector<72x256xf32>
    %cst_69 = arith.constant dense<0.000000e+00> : vector<8x256xf32>
    %112 = tpu.matmul %77, %111, %cst_69 {dimension_numbers = #tpu.dot_dimension_numbers<[1], [0], [0], [1], [0, 0, 1, 1], [], []>} : vector<8x72xf32>, vector<72x256xf32>, vector<8x256xf32> -> vector<8x256xf32>
    %c0_70 = arith.constant 0 : index
    %c0_71 = arith.constant 0 : index
    %113 = vector.load %arg6[%c0_70, %c0_71] : memref<8x1xf32, #tpu.memory_space<vmem>>, vector<8x1xf32>
    %114 = vector.broadcast %113 : vector<8x1xf32> to vector<8x256xf32>
    %115 = arith.mulf %112, %114 : vector<8x256xf32>
    %c0_72 = arith.constant 0 : index
    %c0_73 = arith.constant 0 : index
    %116 = vector.load %arg7[%c0_72, %c0_73] : memref<8x1xf32, #tpu.memory_space<vmem>>, vector<8x1xf32>
    %117 = vector.broadcast %116 : vector<8x1xf32> to vector<8x256xf32>
    %118 = arith.addf %115, %117 : vector<8x256xf32>
    %119 = arith.addf %118, %1 : vector<8x256xf32>
    %cst_74 = arith.constant 0.000000e+00 : f32
    %120 = vector.broadcast %cst_74 : f32 to vector<8x256xf32>
    %121 = arith.maximumf %119, %120 : vector<8x256xf32>
    %c0_75 = arith.constant 0 : index
    %c0_76 = arith.constant 0 : index
    %c0_77 = arith.constant 0 : index
    %122 = vector.load %arg8[%c0_75, %c0_76, %c0_77] : memref<1x8x256xf32, #tpu.memory_space<vmem>>, vector<1x8x256xf32>
    %123 = vector.shape_cast %122 : vector<1x8x256xf32> to vector<8x256xf32>
    %124 = vector.shape_cast %121 : vector<8x256xf32> to vector<1x8x256xf32>
    tpu.vector_store %arg8[%c0_75, %c0_76, %c0_77], %124 {strides = array<i32>} : memref<1x8x256xf32, #tpu.memory_space<vmem>>, vector<1x8x256xf32>,
    return
  }
  func.func @transform_0(%arg0: i32) -> (i32, i32, i32) {
    %c0_i32 = arith.constant 0 : i32
    %c0_i32_0 = arith.constant 0 : i32
    %c0_i32_1 = arith.constant 0 : i32
    return %arg0, %c0_i32, %c0_i32_0 : i32, i32, i32
  }
  func.func @transform_1(%arg0: i32) -> (i32, i32) {
    %c0_i32 = arith.constant 0 : i32
    %c0_i32_0 = arith.constant 0 : i32
    %c0_i32_1 = arith.constant 0 : i32
    return %c0_i32, %c0_i32_0 : i32, i32
  }
  func.func @transform_2(%arg0: i32) -> (i32, i32) {
    %c0_i32 = arith.constant 0 : i32
    %c0_i32_0 = arith.constant 0 : i32
    %c0_i32_1 = arith.constant 0 : i32
    return %c0_i32, %c0_i32_0 : i32, i32
  }
  func.func @transform_3(%arg0: i32) -> (i32, i32) {
    %c0_i32 = arith.constant 0 : i32
    %c0_i32_0 = arith.constant 0 : i32
    %c0_i32_1 = arith.constant 0 : i32
    return %c0_i32, %c0_i32_0 : i32, i32
  }
  func.func @transform_4(%arg0: i32) -> (i32, i32) {
    %c0_i32 = arith.constant 0 : i32
    %c0_i32_0 = arith.constant 0 : i32
    %c0_i32_1 = arith.constant 0 : i32
    return %c0_i32, %c0_i32_0 : i32, i32
  }
  func.func @transform_5(%arg0: i32) -> (i32, i32) {
    %c0_i32 = arith.constant 0 : i32
    %c0_i32_0 = arith.constant 0 : i32
    %c0_i32_1 = arith.constant 0 : i32
    return %c0_i32, %c0_i32_0 : i32, i32
  }
  func.func @transform_6(%arg0: i32) -> (i32, i32) {
    %c0_i32 = arith.constant 0 : i32
    %c0_i32_0 = arith.constant 0 : i32
    %c0_i32_1 = arith.constant 0 : i32
    return %c0_i32, %c0_i32_0 : i32, i32
  }
  func.func @transform_7(%arg0: i32) -> (i32, i32, i32) {
    %c0_i32 = arith.constant 0 : i32
    %c0_i32_0 = arith.constant 0 : i32
    %c0_i32_1 = arith.constant 0 : i32
    return %arg0, %c0_i32, %c0_i32_0 : i32, i32, i32
  }
}

</mosaic_0001>

<llo_original>
// kernel: tpu_custom_call.1
$region0: #{tpu_custom_call.1}
  #allocation0 [shape = 'u32[]', space=smem, size = 0x4, offset = 0x4, fixed_abs, tag = 'smem constant byte address 0x4 - core index']
  #allocation1 [shape = 'u32[144,128]{1,0:T(1,128)}', space=vmem, size = 0x12000, scoped, tag = 'internal scratch']
  #allocation2 [shape = 'f32[8,401]{1,0:T(8,128)}', space=vmem, size = 0x4000, scoped, tag = 'scratch operand']
  #allocation3 [shape = 'f32[8,401]{1,0:T(8,128)}', space=vmem, size = 0x4000, scoped, tag = 'scratch operand']
  %s0 = inlined_call_operand.vmem [shape: f32[2,8,256], index: 0, kind: input, shape index: {}]
  %s1 = inlined_call_operand.hbm [shape: f32[8,72], index: 1, kind: input, shape index: {}]
  %s2 = inlined_call_operand.vmem [shape: f32[8,72], index: 2, kind: input, shape index: {}]
  %s3 = inlined_call_operand.vmem [shape: f32[8,1], index: 3, kind: input, shape index: {}]
  %s4 = inlined_call_operand.vmem [shape: f32[8,1], index: 4, kind: input, shape index: {}]
  %s5 = inlined_call_operand.vmem [shape: f32[8,1], index: 5, kind: input, shape index: {}]
  %s6 = inlined_call_operand.vmem [shape: f32[8,1], index: 6, kind: input, shape index: {}]
  %s7 = inlined_call_operand.hbm [shape: f32[2,8,256], index: 7, kind: output, shape index: {}]
  %s8 = sld [smem:[#allocation0]]
  $region65: #{tpu_custom_call.1} parent=0
    _
  %s10 = ssub.s32 1, %s8
  %s11 = scalar_select 0, %s10, %s8
  $region1: #{tpu_custom_call.1} parent=0
    #allocation4 [shape = 'u8[4096]{0}', space=vmem, size = 0x1000, scoped, tag = 'input window, operand 1, single buffered']
    #allocation5 [shape = 's32[2]{0}', space=sflag, size = 0x8, scoped, tag = 'scoped memory for tpu_custom_call.1']
    #allocation6 [shape = 's32[2]{0}', space=sflag, size = 0x8, scoped, tag = 'scoped memory for tpu_custom_call.1']
    #allocation7 [shape = 'u8[16384]{0}', space=vmem, size = 0x4000, scoped, tag = 'output window, operand 0']
    %12 = vsyncpa [#allocation5], 0
    %13 = vsyncpa [#allocation6], 0
    %s14 = scalar_lea.sflag [#allocation6], 1
    %15 = vsyncpa %s14, 0
    loop: start=0, step=1, limit=4
    $region2: #{tpu_custom_call.1} parent=1 // loop_pre_header
      _
    $region3: #{tpu_custom_call.1} parent=1 // loop_header
      %s17 = sphi 0, %s21
      %p18 = scmp.ge.s32.totalorder %s17, 4
      %s27 = sphi 0, %s29
      %s30 = sphi 0, %s27
      %s31 = sphi 0, %s30
      %s47 = sphi 0, %s31
      %s51 = sphi 0, %s51
      %s53 = sphi 0, %s51
      %s54 = sphi 0, %s53
      %s68 = sphi 0, %s54
      %s72 = sphi 0, %s72
      %s74 = sphi 0, %s72
      %s75 = sphi 0, %s74
      %s89 = sphi 0, %s75
      %s93 = sphi 0, %s93
      %s95 = sphi 0, %s93
      %s96 = sphi 0, %s95
      %s110 = sphi 0, %s96
      %s114 = sphi 0, %s114
      %s116 = sphi 0, %s114
      %s117 = sphi 0, %s116
      %s131 = sphi 0, %s117
      %s135 = sphi 0, %s135
      %s137 = sphi 0, %s135
      %s138 = sphi 0, %s137
      %s152 = sphi 0, %s138
      %s156 = sphi 0, %s156
      %s158 = sphi 0, %s156
      %s159 = sphi 0, %s158
      %s173 = sphi 0, %s159
      %s179 = sphi 0, %s181
      %s182 = sphi 0, %s179
      %s183 = sphi 0, %s182
      %s199 = sphi 0, %s183
    $region4: #{tpu_custom_call.1} parent=1 // loop_header_branch
      %20 = sbr.rel (%p18) target = $region8
    $region5: #{tpu_custom_call.1} parent=1 // loop_body
      %s22 = ssub.s32 %s17, 1
      %s23 = ssub.s32 %s17, 2
      %s24 = sadd.s32 %s17, 1
      %s25 = ssub.s32 %s17, %s24
      %p26 = scmp.eq.s32.totalorder %s25, 0
      %s28 = sadd.s32 %s27, 1
      %s29 = scalar_select %p26, %s27, %s28
      %p32 = pneg %p26
      %p33 = scmp.eq.s32.totalorder %s17, 1
      %p34 = por %p32, %p33
      %p35 = scmp.ne.s32.totalorder %s27, %s30
      %p36 = scmp.eq.s32.totalorder %s17, 0
      %p37 = por %p35, %p36
      %p38 = scmp.ne.s32.totalorder %s27, %s30
      %p39 = scmp.eq.s32.totalorder %s22, 1
      %p40 = por %p38, %p39
      %p41 = scmp.ne.s32.totalorder %s30, %s31
      %p42 = scmp.eq.s32.totalorder %s22, 0
      %p43 = por %p41, %p42
      %p44 = scmp.ne.s32.totalorder %s30, %s31
      %p45 = scmp.eq.s32.totalorder %s23, 1
      %p46 = por %p44, %p45
      %p48 = scmp.ne.s32.totalorder %s31, %s47
      %p49 = scmp.eq.s32.totalorder %s23, 0
      %p50 = por %p48, %p49
      %s52 = sadd.s32 %s51, 1
      %p55 = scmp.eq.s32.totalorder %s17, 1
      %p56 = scmp.ne.s32.totalorder %s51, %s53
      %p57 = scmp.eq.s32.totalorder %s17, 0
      %p58 = por %p56, %p57
      %p59 = scmp.ne.s32.totalorder %s51, %s53
      %p60 = scmp.eq.s32.totalorder %s22, 1
      %p61 = por %p59, %p60
      %p62 = scmp.ne.s32.totalorder %s53, %s54
      %p63 = scmp.eq.s32.totalorder %s22, 0
      %p64 = por %p62, %p63
      %p65 = scmp.ne.s32.totalorder %s53, %s54
      %p66 = scmp.eq.s32.totalorder %s23, 1
      %p67 = por %p65, %p66
      %p69 = scmp.ne.s32.totalorder %s54, %s68
      %p70 = scmp.eq.s32.totalorder %s23, 0
      %p71 = por %p69, %p70
      %s73 = sadd.s32 %s72, 1
      %p76 = scmp.eq.s32.totalorder %s17, 1
      %p77 = scmp.ne.s32.totalorder %s72, %s74
      %p78 = scmp.eq.s32.totalorder %s17, 0
      %p79 = por %p77, %p78
      %p80 = scmp.ne.s32.totalorder %s72, %s74
      %p81 = scmp.eq.s32.totalorder %s22, 1
      %p82 = por %p80, %p81
      %p83 = scmp.ne.s32.totalorder %s74, %s75
      %p84 = scmp.eq.s32.totalorder %s22, 0
      %p85 = por %p83, %p84
      %p86 = scmp.ne.s32.totalorder %s74, %s75
      %p87 = scmp.eq.s32.totalorder %s23, 1
      %p88 = por %p86, %p87
      %p90 = scmp.ne.s32.totalorder %s75, %s89
      %p91 = scmp.eq.s32.totalorder %s23, 0
      %p92 = por %p90, %p91
      %s94 = sadd.s32 %s93, 1
      %p97 = scmp.eq.s32.totalorder %s17, 1
      %p98 = scmp.ne.s32.totalorder %s93, %s95
      %p99 = scmp.eq.s32.totalorder %s17, 0
      %p100 = por %p98, %p99
      %p101 = scmp.ne.s32.totalorder %s93, %s95
      %p102 = scmp.eq.s32.totalorder %s22, 1
      %p103 = por %p101, %p102
      %p104 = scmp.ne.s32.totalorder %s95, %s96
      %p105 = scmp.eq.s32.totalorder %s22, 0
      %p106 = por %p104, %p105
      %p107 = scmp.ne.s32.totalorder %s95, %s96
      %p108 = scmp.eq.s32.totalorder %s23, 1
      %p109 = por %p107, %p108
      %p111 = scmp.ne.s32.totalorder %s96, %s110
      %p112 = scmp.eq.s32.totalorder %s23, 0
      %p113 = por %p111, %p112
      %s115 = sadd.s32 %s114, 1
      %p118 = scmp.eq.s32.totalorder %s17, 1
      %p119 = scmp.ne.s32.totalorder %s114, %s116
      %p120 = scmp.eq.s32.totalorder %s17, 0
      %p121 = por %p119, %p120
      %p122 = scmp.ne.s32.totalorder %s114, %s116
      %p123 = scmp.eq.s32.totalorder %s22, 1
      %p124 = por %p122, %p123
      %p125 = scmp.ne.s32.totalorder %s116, %s117
      %p126 = scmp.eq.s32.totalorder %s22, 0
      %p127 = por %p125, %p126
      %p128 = scmp.ne.s32.totalorder %s116, %s117
      %p129 = scmp.eq.s32.totalorder %s23, 1
      %p130 = por %p128, %p129
      %p132 = scmp.ne.s32.totalorder %s117, %s131
      %p133 = scmp.eq.s32.totalorder %s23, 0
      %p134 = por %p132, %p133
      %s136 = sadd.s32 %s135, 1
      %p139 = scmp.eq.s32.totalorder %s17, 1
      %p140 = scmp.ne.s32.totalorder %s135, %s137
      %p141 = scmp.eq.s32.totalorder %s17, 0
      %p142 = por %p140, %p141
      %p143 = scmp.ne.s32.totalorder %s135, %s137
      %p144 = scmp.eq.s32.totalorder %s22, 1
      %p145 = por %p143, %p144
      %p146 = scmp.ne.s32.totalorder %s137, %s138
      %p147 = scmp.eq.s32.totalorder %s22, 0
      %p148 = por %p146, %p147
      %p149 = scmp.ne.s32.totalorder %s137, %s138
      %p150 = scmp.eq.s32.totalorder %s23, 1
      %p151 = por %p149, %p150
      %p153 = scmp.ne.s32.totalorder %s138, %s152
      %p154 = scmp.eq.s32.totalorder %s23, 0
      %p155 = por %p153, %p154
      %s157 = sadd.s32 %s156, 1
      %p160 = scmp.eq.s32.totalorder %s17, 1
      %p161 = scmp.ne.s32.totalorder %s156, %s158
      %p162 = scmp.eq.s32.totalorder %s17, 0
      %p163 = por %p161, %p162
      %p164 = scmp.ne.s32.totalorder %s156, %s158
      %p165 = scmp.eq.s32.totalorder %s22, 1
      %p166 = por %p164, %p165
      %p167 = scmp.ne.s32.totalorder %s158, %s159
      %p168 = scmp.eq.s32.totalorder %s22, 0
      %p169 = por %p167, %p168
      %p170 = scmp.ne.s32.totalorder %s158, %s159
      %p171 = scmp.eq.s32.totalorder %s23, 1
      %p172 = por %p170, %p171
      %p174 = scmp.ne.s32.totalorder %s159, %s173
      %p175 = scmp.eq.s32.totalorder %s23, 0
      %p176 = por %p174, %p175
      %s177 = ssub.s32 %s17, %s24
      %p178 = scmp.eq.s32.totalorder %s177, 0
      %s180 = sadd.s32 %s179, 1
      %s181 = scalar_select %p178, %s179, %s180
      %p184 = pneg %p178
      %p185 = scmp.eq.s32.totalorder %s17, 1
      %p186 = por %p184, %p185
      %p187 = scmp.ne.s32.totalorder %s179, %s182
      %p188 = scmp.eq.s32.totalorder %s17, 0
      %p189 = por %p187, %p188
      %p190 = scmp.ne.s32.totalorder %s179, %s182
      %p191 = scmp.eq.s32.totalorder %s22, 1
      %p192 = por %p190, %p191
      %p193 = scmp.ne.s32.totalorder %s182, %s183
      %p194 = scmp.eq.s32.totalorder %s22, 0
      %p195 = por %p193, %p194
      %p196 = scmp.ne.s32.totalorder %s182, %s183
      %p197 = scmp.eq.s32.totalorder %s23, 1
      %p198 = por %p196, %p197
      %p200 = scmp.ne.s32.totalorder %s183, %s199
      %p201 = scmp.eq.s32.totalorder %s23, 0
      %p202 = por %p200, %p201
      %p203 = scmp.le.s32.totalorder 1, %s17
      %p204 = scmp.lt.s32.totalorder %s17, 3
      %p205 = pnand %p203, %p204
      %p206 = pneg %p205
      // Predicated region
      $region9: #{tpu_custom_call.1} parent=5 // pred_check
        _
      $region10: #{tpu_custom_call.1} parent=5 // pred_check_branch
        %208 = sbr.rel (%p205) target = $region12
      $region11: #{tpu_custom_call.1} parent=5 // pred_region
        %s209 = ssub.s32 %s17, 1
        // Predicated region
        $region13: #{tpu_custom_call.1} parent=11 // pred_check
          %p210 = pneg %p64
        $region14: #{tpu_custom_call.1} parent=11 // pred_check_branch
          %212 = sbr.rel (%p210) target = $region16
        $region15: #{tpu_custom_call.1} parent=11 // pred_region
          %s214 = ssub.s32 128, 128
          %215 = vsyncadd [#allocation5], %s214
          %s217 = sshll.u32 [#allocation4], 4
          %s218 = int_to_ptr.vmem [resolvable:$true] %s217
          %220 = dma.hbm_to_vmem [thread:$0]  %s1, 128, %s218, [#allocation5]
        $region16: #{tpu_custom_call.1} parent=11 // pred_fallthru
          _
        // Predicated region
        $region17: #{tpu_custom_call.1} parent=11 // pred_check
          %p221 = pneg %p85
        $region18: #{tpu_custom_call.1} parent=11 // pred_check_branch
          %223 = sbr.rel (%p221) target = $region20
        $region19: #{tpu_custom_call.1} parent=11 // pred_region
          _
        $region20: #{tpu_custom_call.1} parent=11 // pred_fallthru
          _
        // Predicated region
        $region21: #{tpu_custom_call.1} parent=11 // pred_check
          %p224 = pneg %p106
        $region22: #{tpu_custom_call.1} parent=11 // pred_check_branch
          %226 = sbr.rel (%p224) target = $region24
        $region23: #{tpu_custom_call.1} parent=11 // pred_region
          _
        $region24: #{tpu_custom_call.1} parent=11 // pred_fallthru
          _
        // Predicated region
        $region25: #{tpu_custom_call.1} parent=11 // pred_check
          %p227 = pneg %p127
        $region26: #{tpu_custom_call.1} parent=11 // pred_check_branch
          %229 = sbr.rel (%p227) target = $region28
        $region27: #{tpu_custom_call.1} parent=11 // pred_region
          _
        $region28: #{tpu_custom_call.1} parent=11 // pred_fallthru
          _
        // Predicated region
        $region29: #{tpu_custom_call.1} parent=11 // pred_check
          %p230 = pneg %p148
        $region30: #{tpu_custom_call.1} parent=11 // pred_check_branch
          %232 = sbr.rel (%p230) target = $region32
        $region31: #{tpu_custom_call.1} parent=11 // pred_region
          _
        $region32: #{tpu_custom_call.1} parent=11 // pred_fallthru
          _
        // Predicated region
        $region33: #{tpu_custom_call.1} parent=11 // pred_check
          %p233 = pneg %p169
        $region34: #{tpu_custom_call.1} parent=11 // pred_check_branch
          %235 = sbr.rel (%p233) target = $region36
        $region35: #{tpu_custom_call.1} parent=11 // pred_region
          _
        $region36: #{tpu_custom_call.1} parent=11 // pred_fallthru
          _
      $region12: #{tpu_custom_call.1} parent=5 // pred_fallthru
        _
      %p236 = scmp.lt.s32.totalorder %s17, 2
      // Predicated region
      $region37: #{tpu_custom_call.1} parent=5 // pred_check
        %p237 = pneg %p236
      $region38: #{tpu_custom_call.1} parent=5 // pred_check_branch
        %239 = sbr.rel (%p237) target = $region40
      $region39: #{tpu_custom_call.1} parent=5 // pred_region
        // Predicated region
        $region41: #{tpu_custom_call.1} parent=39 // pred_check
          %p240 = pneg %p37
        $region42: #{tpu_custom_call.1} parent=39 // pred_check_branch
          %242 = sbr.rel (%p240) target = $region44
        $region43: #{tpu_custom_call.1} parent=39 // pred_region
          %p243 = scmp.lt.s32.totalorder %s17, 1
          %s244 = scalar_select %p243, %s17, 1
          %s245 = smul.addr %s244, 2
          %s246 = smul.addr %s245, 8
          %s247 = scalar_lea.vmem %s0, %s246
        $region44: #{tpu_custom_call.1} parent=39 // pred_fallthru
          _
      $region40: #{tpu_custom_call.1} parent=5 // pred_fallthru
        _
      %p248 = scmp.le.s32.totalorder 1, %s17
      %p249 = scmp.lt.s32.totalorder %s17, 3
      %p250 = pnand %p248, %p249
      %p251 = pneg %p250
      // Predicated region
      $region45: #{tpu_custom_call.1} parent=5 // pred_check
        _
      $region46: #{tpu_custom_call.1} parent=5 // pred_check_branch
        %253 = sbr.rel (%p250) target = $region48
      $region47: #{tpu_custom_call.1} parent=5 // pred_region
        %s254 = ssub.s32 %s17, 1
        // Predicated region
        $region49: #{tpu_custom_call.1} parent=47 // pred_check
          %p255 = pneg %p64
        $region50: #{tpu_custom_call.1} parent=47 // pred_check_branch
          %257 = sbr.rel (%p255) target = $region52
        $region51: #{tpu_custom_call.1} parent=47 // pred_region
          %258 = dma.done [#allocation5], 128
        $region52: #{tpu_custom_call.1} parent=47 // pred_fallthru
          _
        %p259 = scmp.lt.s32.totalorder %s22, 1
        %s260 = scalar_select %p259, %s22, 1
        %s261 = smul.addr %s260, 2
        %s262 = smul.addr %s261, 8
        %s263 = scalar_lea.vmem %s0, %s262
        %p264 = pneg %p43
        %p265 = pneg %p40
        %p266 = pneg %p64
        %p267 = pneg %p61
        %p268 = pneg %p85
        %p269 = pneg %p82
        %p270 = pneg %p106
        %p271 = pneg %p103
        %p272 = pneg %p127
        %p273 = pneg %p124
        %p274 = pneg %p148
        %p275 = pneg %p145
        %p276 = pneg %p169
        %p277 = pneg %p166
        %p278 = pneg %p195
        %p279 = pneg %p192
        %s280 = sand.u32 %s182, 1
        %s281 = scalar_lea.sflag [#allocation6], %s280
        %s282 = sand.u32 %s182, 1
        %s283 = smul.addr %s282, 16
        %s284 = scalar_lea.vmem [#allocation7], %s283
        %p285 = scmp.lt.s32.totalorder %s22, 1
        %s286 = scalar_select %p285, %s22, 1
        %s287 = smul.addr %s286, 2
        %s288 = smul.addr %s287, 8
        %s289 = scalar_lea.vmem %s0, %s288
        %v290 = vld [vmem:[%s289] sm:$0xff]
        %v291 = vld [vmem:[%s289 + $0x8] sm:$0xff]
        %v292 = vlaneseq
        %v293 = vand.u32 %v292, 127
        %v294 = vadd.s32 %v293, 128
        %vm295 = vcmp.lt.s32.totalorder %v293, 0
        %v296 = vsub.s32 0, %v293
        %v297 = vsel %vm295, %v296, %v293
        %v298 = vshrl.u32 %v297, 4
        %v299 = vand.u32 %v297, 15
        %v300 = vsub.s32 0, %v299
        %v301 = vsel %vm295, %v300, %v299
        %vm302 = vcmp.lt.s32.totalorder %v294, 0
        %v303 = vsub.s32 0, %v294
        %v304 = vsel %vm302, %v303, %v294
        %v305 = vshrl.u32 %v304, 4
        %v306 = vand.u32 %v304, 15
        %v307 = vsub.s32 0, %v306
        %v308 = vsel %vm302, %v307, %v306
        %vm309 = vcmp.ne.s32.totalorder %v301, 0
        %vm310 = vcmp.ne.s32.totalorder %v308, 0
        %vm311 = vcmp.lt.s32.totalorder %v301, 0
        %vm312 = vcmp.lt.s32.totalorder %v308, 0
        %vm313 = vmand %vm311, %vm309
        %vm314 = vmand %vm312, %vm310
        %v315 = vadd.s32 %v301, 16
        %v316 = vadd.s32 %v308, 16
        %v317 = vsel %vm313, %v315, %v301
        %v318 = vsel %vm314, %v316, %v308
        %vm319 = vcmp.ne.s32.totalorder %v317, 0
        %vm320 = vcmp.ne.s32.totalorder %v318, 0
        %vm321 = vcmp.ne.s32.totalorder %v317, 15
        %vm322 = vcmp.ne.s32.totalorder %v318, 15
        %323 = vst [vmem:[#allocation2] sm:$0xff] 0.0
        %vm324 = vcmask 138240
        %325 = vst.msk [vmem:[#allocation2 + $0x18] sm:$0xff] %vm324, 0.0
        %326 = vst [vmem:[#allocation2 + $0x8] sm:$0xff] %v290
        %327 = vst [vmem:[#allocation2 + $0x10] sm:$0xff] %v291
        %v328 = vld [vmem:[#allocation4] sm:$0xff]
        %v329 = vld [vmem:[#allocation2] sm:$0xff]
        %v330 = vld [vmem:[#allocation2 + $0x8] sm:$0xff]
        %v331 = vld [vmem:[#allocation2 + $0x10] sm:$0xff]
        %v332 = vsel %vm319, 1, 0
        %v333 = vsel %vm320, 1, 0
        %vm334 = vcmp.eq.s32.totalorder %v332, 1
        %vm335 = vcmp.eq.s32.totalorder %v333, 1
        %339 = vrot.lane.b32.xlu0 %v329, 17
        %v340 = vpop.permute.xlu0 %339
        %341 = vrot.lane.b32.xlu0 %v330, 17
        %v342 = vpop.permute.xlu0 %341
        %343 = vrot.lane.b32.xlu0 %v331, 17
        %v344 = vpop.permute.xlu0 %343
        %v345 = vsel %vm324, %v340, %v342
        %v346 = vsel %vm324, %v342, %v344
        %v349 = vsel %vm334, %v345, 0.0
        %v350 = vsel %vm335, %v346, 0.0
        %v351 = vsel %vm321, 1, 0
        %v352 = vsel %vm322, 1, 0
        %vm353 = vcmp.eq.s32.totalorder %v351, 1
        %vm354 = vcmp.eq.s32.totalorder %v352, 1
        %355 = vrot.lane.b32.xlu0 %v329, 15
        %v356 = vpop.permute.xlu0 %355
        %357 = vrot.lane.b32.xlu0 %v330, 15
        %v358 = vpop.permute.xlu0 %357
        %359 = vrot.lane.b32.xlu0 %v331, 15
        %v360 = vpop.permute.xlu0 %359
        %vm361 = vcmask 121856
        %v362 = vsel %vm361, %v356, %v358
        %v363 = vsel %vm361, %v358, %v360
        %v366 = vsel %vm353, %v362, 0.0
        %v367 = vsel %vm354, %v363, 0.0
        %368 = vrot.lane.b32.xlu0 %v329, 1
        %v369 = vpop.permute.xlu0 %368
        %370 = vrot.lane.b32.xlu0 %v330, 1
        %v371 = vpop.permute.xlu0 %370
        %372 = vrot.lane.b32.xlu0 %v331, 1
        %v373 = vpop.permute.xlu0 %372
        %vm374 = vcmask 7168
        %v375 = vsel %vm374, %v369, %v371
        %v376 = vsel %vm374, %v371, %v373
        %v379 = vsel %vm334, %v375, 0.0
        %v380 = vsel %vm335, %v376, 0.0
        %v381 = vld [vmem:[#allocation2 + $0x18] sm:$0xff]
        %383 = vrot.lane.b32.xlu0 %v330, 127
        %v384 = vpop.permute.xlu0 %383
        %385 = vrot.lane.b32.xlu0 %v331, 127
        %v386 = vpop.permute.xlu0 %385
        %387 = vrot.lane.b32.xlu0 %v381, 127
        %v388 = vpop.permute.xlu0 %387
        %vm389 = vcmask 1039360
        %v390 = vsel %vm389, %v384, %v386
        %v391 = vsel %vm389, %v386, %v388
        %v394 = vsel %vm353, %v390, 0.0
        %v395 = vsel %vm354, %v391, 0.0
        %396 = vrot.lane.b32.xlu0 %v330, 113
        %v397 = vpop.permute.xlu0 %396
        %398 = vrot.lane.b32.xlu0 %v331, 113
        %v399 = vpop.permute.xlu0 %398
        %400 = vrot.lane.b32.xlu0 %v381, 113
        %v401 = vpop.permute.xlu0 %400
        %vm402 = vcmask 924672
        %v403 = vsel %vm402, %v397, %v399
        %v404 = vsel %vm402, %v399, %v401
        %v407 = vsel %vm334, %v403, 0.0
        %v408 = vsel %vm335, %v404, 0.0
        %409 = vrot.lane.b32.xlu0 %v330, 111
        %v410 = vpop.permute.xlu0 %409
        %411 = vrot.lane.b32.xlu0 %v331, 111
        %v412 = vpop.permute.xlu0 %411
        %413 = vrot.lane.b32.xlu0 %v381, 111
        %v414 = vpop.permute.xlu0 %413
        %vm415 = vcmask 908288
        %v416 = vsel %vm415, %v410, %v412
        %v417 = vsel %vm415, %v412, %v414
        %v420 = vsel %vm353, %v416, 0.0
        %v421 = vsel %vm354, %v417, 0.0
        %422 = vrot.lane.b32.xlu0 %v329, 16
        %v423 = vpop.permute.xlu0 %422
        %424 = vrot.lane.b32.xlu0 %v330, 16
        %v425 = vpop.permute.xlu0 %424
        %426 = vrot.lane.b32.xlu0 %v331, 16
        %v427 = vpop.permute.xlu0 %426
        %vm428 = vcmask 130048
        %v429 = vsel %vm428, %v423, %v425
        %v430 = vsel %vm428, %v425, %v427
        %433 = vrot.lane.b32.xlu0 %v330, 112
        %v434 = vpop.permute.xlu0 %433
        %435 = vrot.lane.b32.xlu0 %v331, 112
        %v436 = vpop.permute.xlu0 %435
        %437 = vrot.lane.b32.xlu0 %v381, 112
        %v438 = vpop.permute.xlu0 %437
        %vm439 = vcmask 916480
        %v440 = vsel %vm439, %v434, %v436
        %v441 = vsel %vm439, %v436, %v438
        %vm444 = vcmask 588800
        %v446 = vsel %vm444, %v328, 0
        %448 = vmatprep.subr.mxu0 %v350
        %449 = vmatpush1.msra.mxu0 %v349
        %450 = vmatprep.subr.mxu0 %v430
        %451 = vmatpush1.msra.mxu0 %v429
        %452 = vmatprep.subr.mxu0 %v367
        %453 = vmatpush1.msra.mxu0 %v366
        %454 = vmatprep.subr.mxu0 %v380
        %455 = vmatpush1.msra.mxu0 %v379
        %456 = vmatprep.subr.mxu0 %v331
        %457 = vmatpush1.msra.mxu0 %v330
        %458 = vmatprep.subr.mxu0 %v395
        %459 = vmatpush1.msra.mxu0 %v394
        %460 = vmatprep.subr.mxu0 %v408
        %461 = vmatpush1.msra.mxu0 %v407
        %462 = vmatprep.subr.mxu0 %v441
        %463 = vmatpush1.msra.mxu0 %v440
        %464 = vmatprep.subr.mxu0 %v421
        %465 = vmatpush1.msra.mxu0 %v420
        %466 = vmatprep.subr.mxu0 0.0
        %467 = vmatpush1.msra.mxu0 0.0
        %468 = vmatprep.subr.mxu0 0.0
        %469 = vmatpush1.msra.mxu0 0.0
        %470 = vmatprep.subr.mxu0 0.0
        %471 = vmatpush1.msra.mxu0 0.0
        %472 = vmatprep.subr.mxu0 0.0
        %473 = vmatpush1.msra.mxu0 0.0
        %474 = vmatprep.subr.mxu0 0.0
        %475 = vmatpush1.msra.mxu0 0.0
        %476 = vmatprep.subr.mxu0 0.0
        %477 = vmatpush1.msra.mxu0 0.0
        %478 = vmatprep.subr.mxu0 0.0
        %479 = vmatpush1.msra.mxu0 0.0
        %480 = vmatprep.subr.mxu0 0.0
        %481 = vmatpush1.msra.mxu0 0.0
        %482 = vmatprep.subr.mxu0 0.0
        %483 = vmatpush1.msra.mxu0 0.0
        %484 = vmatprep.subr.mxu0 0.0
        %485 = vmatpush1.msra.mxu0 0.0
        %486 = vmatprep.subr.mxu0 0.0
        %487 = vmatpush1.msra.mxu0 0.0
        %488 = vmatprep.subr.mxu0 0.0
        %489 = vmatpush1.msra.mxu0 0.0
        %490 = vmatprep.subr.mxu0 0.0
        %491 = vmatpush1.msra.mxu0 0.0
        %492 = vmatprep.subr.mxu0 0.0
        %493 = vmatpush1.msra.mxu0 0.0
        %494 = vmatprep.subr.mxu0 0.0
        %495 = vmatpush1.msra.mxu0 0.0
        %496 = vmatprep.subr.mxu0 0.0
        %497 = vmatpush1.msra.mxu0 0.0
        %498 = vmatprep.subr.mxu0 0.0
        %499 = vmatpush1.msra.mxu0 0.0
        %500 = vmatprep.subr.mxu0 0.0
        %501 = vmatpush1.msra.mxu0 0.0
        %502 = vmatprep.subr.mxu0 0.0
        %503 = vmatpush1.msra.mxu0 0.0
        %504 = vmatprep.subr.mxu0 0.0
        %505 = vmatpush1.msra.mxu0 0.0
        %506 = vmatprep.subr.mxu0 0.0
        %507 = vmatpush1.msra.mxu0 0.0
        %508 = vmatprep.subr.mxu0 0.0
        %509 = vmatpush1.msra.mxu0 0.0
        %510 = vmatprep.subr.mxu0 0.0
        %511 = vmatpush1.msra.mxu0 0.0
        %512 = vmatprep.mubr.f32.mxu0 0.0
        %513 = vmatmul.mubr.f32.gmra.mrb[0].mxu0 %v446
        %v514 = vpop.f32.mrb[0].mxu0
        %v515 = vadd.f32 0.0, %v514
        %v516 = vpop.f32.mrb[0].mxu0
        %v517 = vadd.f32 0.0, %v516
        %518 = vdwg.mxu0
        %v519 = vld [vmem:[%s3] sm:$0xff]
        %521 = vset.pattern.permute.xlu0 0
        %522 = vperm.xlu0 %521, %v519
        %v523 = vpop.permute.xlu0 %522
        %v525 = vmul.f32 %v515, %v523
        %v526 = vmul.f32 %v517, %v523
        %v527 = vld [vmem:[%s4] sm:$0xff]
        %529 = vset.pattern.permute.xlu0 0
        %530 = vperm.xlu0 %529, %v527
        %v531 = vpop.permute.xlu0 %530
        %v533 = vadd.f32 %v525, %v531
        %v534 = vadd.f32 %v526, %v531
        %v535 = vmax.f32 %v533, 0.0
        %v536 = vmax.f32 %v534, 0.0
        %537 = vst [vmem:[#allocation3] sm:$0xff] 0.0
        %538 = vst.msk [vmem:[#allocation3 + $0x18] sm:$0xff] %vm324, 0.0
        %539 = vst [vmem:[#allocation3 + $0x8] sm:$0xff] %v535
        %540 = vst [vmem:[#allocation3 + $0x10] sm:$0xff] %v536
        %v541 = vld [vmem:[%s2] sm:$0xff]
        %v542 = vld [vmem:[#allocation3] sm:$0xff]
        %v543 = vld [vmem:[#allocation3 + $0x8] sm:$0xff]
        %v544 = vld [vmem:[#allocation3 + $0x10] sm:$0xff]
        %548 = vrot.lane.b32.xlu0 %v542, 17
        %v549 = vpop.permute.xlu0 %548
        %550 = vrot.lane.b32.xlu0 %v543, 17
        %v551 = vpop.permute.xlu0 %550
        %552 = vrot.lane.b32.xlu0 %v544, 17
        %v553 = vpop.permute.xlu0 %552
        %v554 = vsel %vm324, %v549, %v551
        %v555 = vsel %vm324, %v551, %v553
        %v558 = vsel %vm334, %v554, 0.0
        %v559 = vsel %vm335, %v555, 0.0
        %560 = vrot.lane.b32.xlu0 %v542, 15
        %v561 = vpop.permute.xlu0 %560
        %562 = vrot.lane.b32.xlu0 %v543, 15
        %v563 = vpop.permute.xlu0 %562
        %564 = vrot.lane.b32.xlu0 %v544, 15
        %v565 = vpop.permute.xlu0 %564
        %v566 = vsel %vm361, %v561, %v563
        %v567 = vsel %vm361, %v563, %v565
        %v570 = vsel %vm353, %v566, 0.0
        %v571 = vsel %vm354, %v567, 0.0
        %572 = vrot.lane.b32.xlu0 %v542, 1
        %v573 = vpop.permute.xlu0 %572
        %574 = vrot.lane.b32.xlu0 %v543, 1
        %v575 = vpop.permute.xlu0 %574
        %576 = vrot.lane.b32.xlu0 %v544, 1
        %v577 = vpop.permute.xlu0 %576
        %v578 = vsel %vm374, %v573, %v575
        %v579 = vsel %vm374, %v575, %v577
        %v582 = vsel %vm334, %v578, 0.0
        %v583 = vsel %vm335, %v579, 0.0
        %v584 = vld [vmem:[#allocation3 + $0x18] sm:$0xff]
        %586 = vrot.lane.b32.xlu0 %v543, 127
        %v587 = vpop.permute.xlu0 %586
        %588 = vrot.lane.b32.xlu0 %v544, 127
        %v589 = vpop.permute.xlu0 %588
        %590 = vrot.lane.b32.xlu0 %v584, 127
        %v591 = vpop.permute.xlu0 %590
        %v592 = vsel %vm389, %v587, %v589
        %v593 = vsel %vm389, %v589, %v591
        %v596 = vsel %vm353, %v592, 0.0
        %v597 = vsel %vm354, %v593, 0.0
        %598 = vrot.lane.b32.xlu0 %v543, 113
        %v599 = vpop.permute.xlu0 %598
        %600 = vrot.lane.b32.xlu0 %v544, 113
        %v601 = vpop.permute.xlu0 %600
        %602 = vrot.lane.b32.xlu0 %v584, 113
        %v603 = vpop.permute.xlu0 %602
        %v604 = vsel %vm402, %v599, %v601
        %v605 = vsel %vm402, %v601, %v603
        %v608 = vsel %vm334, %v604, 0.0
        %v609 = vsel %vm335, %v605, 0.0
        %610 = vrot.lane.b32.xlu0 %v543, 111
        %v611 = vpop.permute.xlu0 %610
        %612 = vrot.lane.b32.xlu0 %v544, 111
        %v613 = vpop.permute.xlu0 %612
        %614 = vrot.lane.b32.xlu0 %v584, 111
        %v615 = vpop.permute.xlu0 %614
        %v616 = vsel %vm415, %v611, %v613
        %v617 = vsel %vm415, %v613, %v615
        %v620 = vsel %vm353, %v616, 0.0
        %v621 = vsel %vm354, %v617, 0.0
        %622 = vrot.lane.b32.xlu0 %v542, 16
        %v623 = vpop.permute.xlu0 %622
        %624 = vrot.lane.b32.xlu0 %v543, 16
        %v625 = vpop.permute.xlu0 %624
        %626 = vrot.lane.b32.xlu0 %v544, 16
        %v627 = vpop.permute.xlu0 %626
        %v628 = vsel %vm428, %v623, %v625
        %v629 = vsel %vm428, %v625, %v627
        %632 = vrot.lane.b32.xlu0 %v543, 112
        %v633 = vpop.permute.xlu0 %632
        %634 = vrot.lane.b32.xlu0 %v544, 112
        %v635 = vpop.permute.xlu0 %634
        %636 = vrot.lane.b32.xlu0 %v584, 112
        %v637 = vpop.permute.xlu0 %636
        %v638 = vsel %vm439, %v633, %v635
        %v639 = vsel %vm439, %v635, %v637
        %v643 = vsel %vm444, %v541, 0
        %645 = vmatprep.subr.mxu0 %v559
        %646 = vmatpush1.msra.mxu0 %v558
        %647 = vmatprep.subr.mxu0 %v629
        %648 = vmatpush1.msra.mxu0 %v628
        %649 = vmatprep.subr.mxu0 %v571
        %650 = vmatpush1.msra.mxu0 %v570
        %651 = vmatprep.subr.mxu0 %v583
        %652 = vmatpush1.msra.mxu0 %v582
        %653 = vmatprep.subr.mxu0 %v544
        %654 = vmatpush1.msra.mxu0 %v543
        %655 = vmatprep.subr.mxu0 %v597
        %656 = vmatpush1.msra.mxu0 %v596
        %657 = vmatprep.subr.mxu0 %v609
        %658 = vmatpush1.msra.mxu0 %v608
        %659 = vmatprep.subr.mxu0 %v639
        %660 = vmatpush1.msra.mxu0 %v638
        %661 = vmatprep.subr.mxu0 %v621
        %662 = vmatpush1.msra.mxu0 %v620
        %663 = vmatprep.subr.mxu0 0.0
        %664 = vmatpush1.msra.mxu0 0.0
        %665 = vmatprep.subr.mxu0 0.0
        %666 = vmatpush1.msra.mxu0 0.0
        %667 = vmatprep.subr.mxu0 0.0
        %668 = vmatpush1.msra.mxu0 0.0
        %669 = vmatprep.subr.mxu0 0.0
        %670 = vmatpush1.msra.mxu0 0.0
        %671 = vmatprep.subr.mxu0 0.0
        %672 = vmatpush1.msra.mxu0 0.0
        %673 = vmatprep.subr.mxu0 0.0
        %674 = vmatpush1.msra.mxu0 0.0
        %675 = vmatprep.subr.mxu0 0.0
        %676 = vmatpush1.msra.mxu0 0.0
        %677 = vmatprep.subr.mxu0 0.0
        %678 = vmatpush1.msra.mxu0 0.0
        %679 = vmatprep.subr.mxu0 0.0
        %680 = vmatpush1.msra.mxu0 0.0
        %681 = vmatprep.subr.mxu0 0.0
        %682 = vmatpush1.msra.mxu0 0.0
        %683 = vmatprep.subr.mxu0 0.0
        %684 = vmatpush1.msra.mxu0 0.0
        %685 = vmatprep.subr.mxu0 0.0
        %686 = vmatpush1.msra.mxu0 0.0
        %687 = vmatprep.subr.mxu0 0.0
        %688 = vmatpush1.msra.mxu0 0.0
        %689 = vmatprep.subr.mxu0 0.0
        %690 = vmatpush1.msra.mxu0 0.0
        %691 = vmatprep.subr.mxu0 0.0
        %692 = vmatpush1.msra.mxu0 0.0
        %693 = vmatprep.subr.mxu0 0.0
        %694 = vmatpush1.msra.mxu0 0.0
        %695 = vmatprep.subr.mxu0 0.0
        %696 = vmatpush1.msra.mxu0 0.0
        %697 = vmatprep.subr.mxu0 0.0
        %698 = vmatpush1.msra.mxu0 0.0
        %699 = vmatprep.subr.mxu0 0.0
        %700 = vmatpush1.msra.mxu0 0.0
        %701 = vmatprep.subr.mxu0 0.0
        %702 = vmatpush1.msra.mxu0 0.0
        %703 = vmatprep.subr.mxu0 0.0
        %704 = vmatpush1.msra.mxu0 0.0
        %705 = vmatprep.subr.mxu0 0.0
        %706 = vmatpush1.msra.mxu0 0.0
        %707 = vmatprep.subr.mxu0 0.0
        %708 = vmatpush1.msra.mxu0 0.0
        %709 = vmatprep.mubr.f32.mxu0 0.0
        %710 = vmatmul.mubr.f32.gmra.mrb[0].mxu0 %v643
        %v711 = vpop.f32.mrb[0].mxu0
        %v712 = vadd.f32 0.0, %v711
        %v713 = vpop.f32.mrb[0].mxu0
        %v714 = vadd.f32 0.0, %v713
        %715 = vdwg.mxu0
        %v716 = vld [vmem:[%s5] sm:$0xff]
        %718 = vset.pattern.permute.xlu0 0
        %719 = vperm.xlu0 %718, %v716
        %v720 = vpop.permute.xlu0 %719
        %v722 = vmul.f32 %v712, %v720
        %v723 = vmul.f32 %v714, %v720
        %v724 = vld [vmem:[%s6] sm:$0xff]
        %726 = vset.pattern.permute.xlu0 0
        %727 = vperm.xlu0 %726, %v724
        %v728 = vpop.permute.xlu0 %727
        %v730 = vadd.f32 %v722, %v728
        %v731 = vadd.f32 %v723, %v728
        %v732 = vadd.f32 %v730, %v290
        %v733 = vadd.f32 %v731, %v291
        %v734 = vmax.f32 %v732, 0.0
        %v735 = vmax.f32 %v733, 0.0
        %736 = vst [vmem:[%s284] sm:$0xff] %v734
        %737 = vst [vmem:[%s284 + $0x8] sm:$0xff] %v735
        %s738 = sand.u32 %s182, 1
        %s739 = scalar_lea.sflag [#allocation6], %s738
        %s740 = sand.u32 %s182, 1
        %s741 = smul.addr %s740, 16
        %s742 = scalar_lea.vmem [#allocation7], %s741
        // Predicated region
        $region53: #{tpu_custom_call.1} parent=47 // pred_check
          %p743 = pneg %p192
        $region54: #{tpu_custom_call.1} parent=47 // pred_check_branch
          %745 = sbr.rel (%p743) target = $region56
        $region55: #{tpu_custom_call.1} parent=47 // pred_region
          %s747 = ssub.s32 256, 256
          %748 = vsyncadd %s739, %s747
          %s749 = smul.addr %s22, 2
          %s750 = smul.addr %s749, 128
          %s751 = scalar_lea.hbm %s7, %s750
          %s753 = sshll.u32 %s742, 4
          %s754 = int_to_ptr.vmem [resolvable:$true] %s753
          %756 = dma.vmem_to_hbm [thread:$0]  %s754, 256, %s751, %s739
        $region56: #{tpu_custom_call.1} parent=47 // pred_fallthru
          _
      $region48: #{tpu_custom_call.1} parent=5 // pred_fallthru
        _
      %p757 = scmp.le.s32.totalorder 2, %s17
      // Predicated region
      $region57: #{tpu_custom_call.1} parent=5 // pred_check
        %p758 = pneg %p757
      $region58: #{tpu_custom_call.1} parent=5 // pred_check_branch
        %760 = sbr.rel (%p758) target = $region60
      $region59: #{tpu_custom_call.1} parent=5 // pred_region
        %s761 = ssub.s32 %s17, 2
        // Predicated region
        $region61: #{tpu_custom_call.1} parent=59 // pred_check
          %p762 = pneg %p198
        $region62: #{tpu_custom_call.1} parent=59 // pred_check_branch
          %764 = sbr.rel (%p762) target = $region64
        $region63: #{tpu_custom_call.1} parent=59 // pred_region
          %s765 = sand.u32 %s183, 1
          %s766 = scalar_lea.sflag [#allocation6], %s765
          %s767 = sand.u32 %s183, 1
          %s768 = smul.addr %s767, 16
          %s769 = scalar_lea.vmem [#allocation7], %s768
          %770 = dma.done %s766, 256
        $region64: #{tpu_custom_call.1} parent=59 // pred_fallthru
          _
      $region60: #{tpu_custom_call.1} parent=5 // pred_fallthru
        _
    $region6: #{tpu_custom_call.1} parent=1 // loop_footer
      %s21 = sadd.s32 1, %s17
    $region7: #{tpu_custom_call.1} parent=1 // loop_footer_branch
      %16 = sbr.rel target = $region3
    $region8: #{tpu_custom_call.1} parent=1 // loop_exit
      _
    %771 = vsyncpa [#allocation5], 1
    %s772 = scalar_lea.sflag [#allocation5], 1
    %773 = vsyncpa %s772, 1
    %774 = vsyncpa [#allocation6], 1
    %s775 = scalar_lea.sflag [#allocation6], 1
    %776 = vsyncpa %s775, 1

</llo_original>
